<compile_context>
chip_gen: v7x
topology: tpu7x:2x2x1
jax: 0.10.0
libtpu: 0.0.40
codegen_flags: <defaults>
</compile_context>

<pallas_src>
import jax
import jax.numpy as jnp
from jax.experimental import pallas as pl
from jax.experimental.pallas import tpu as pltpu

LAM = 0.5  # PGLR(lam=0.5); the module has no learnable parameters.


def pglr_kernel(logits_g_ref, logits_p_ref, targets_ref, ca_ref, ce_ref):
    lg = logits_g_ref[...].astype(jnp.float32)   # (TB, C)
    tg = targets_ref[...]                        # (TB, 1) int32
    ca = ca_ref[...].astype(jnp.float32)         # (TB, P)

    tb, c = lg.shape

    # --- one-hot targets over class dim (== zeros.scatter_(1, targets, 1)) ---
    cls_ids = jax.lax.broadcasted_iota(jnp.int32, (tb, c), 1)
    one_hot = (cls_ids == tg).astype(jnp.float32)                    # (TB, C)

    # --- part weights: softmax over part axis P (tiny tensor) ---
    ca_max = jnp.max(ca, axis=1, keepdims=True)
    ca_exp = jnp.exp(ca - ca_max)
    w = ca_exp * pl.reciprocal(
        jnp.sum(ca_exp, axis=1, keepdims=True), approx=True)         # (TB, P)

    # --- part predictions: softmax over the class axis, which is the minor
    # (lane) axis of the (TB, P, C) tile -> fully lane-dense VPU/EUP work.
    # The tile is read twice (max, then fused into the exp) so only lp_exp has
    # to be live at full width; the per-part 1/denominator is fused with the
    # part weight so the big tensor sees a single multiply, no divide. ---
    lp_max = jnp.max(logits_p_ref[...].astype(jnp.float32),
                     axis=2, keepdims=True)                          # (TB, P, 1)
    lp_exp = jnp.exp(logits_p_ref[...].astype(jnp.float32) - lp_max) # (TB, P, C)
    denom = jnp.sum(lp_exp, axis=2, keepdims=True)                   # (TB, P, 1)
    scale = w[:, :, None] * pl.reciprocal(denom, approx=True)        # (TB, P, 1)
    # TODO(synk): PyTorch .detach()-es this branch; forward value is identical,
    # but training parity would need a custom_vjp that blocks grads to lp/ca.
    ensembled = jnp.sum(lp_exp * scale, axis=1)                      # (TB, C)

    refined = LAM * one_hot + (1.0 - LAM) * ensembled                # (TB, C)

    # --- log-softmax of global logits over class dim ---
    lg_max = jnp.max(lg, axis=1, keepdims=True)
    lg_shift = lg - lg_max
    log_preds_g = lg_shift - jnp.log(
        jnp.sum(jnp.exp(lg_shift), axis=1, keepdims=True))           # (TB, C)

    # per-sample cross-entropy partials; mean is done by the wrapper
    ce_ref[...] = jnp.sum(-refined * log_preds_g, axis=1, keepdims=True)


def _round_up(x, m):
    return ((x + m - 1) // m) * m


def _vmem_limits():
    """(vmem_limit_bytes, tile_budget_bytes) per TPU generation."""
    phys = 64 << 20  # assume the smallest (v7x: 64 MiB) if the query fails
    try:
        phys = int(pltpu.get_tpu_info().vmem_capacity_bytes)
    except Exception:
        pass
    if phys <= (64 << 20):
        limit = 48 << 20          # v7x: stay well under 64 MiB physical
    else:
        limit = 64 << 20          # v5e / v6e: 128 MiB physical, raise scoped default
    budget = limit - (8 << 20)    # headroom for compiler-internal scratch
    return limit, budget


def _choose_batch_tile(b, c, p, budget_bytes):
    """Rows per grid step, from a Mosaic (8,128)-padded f32 VMEM model."""
    c_pad = _round_up(c, 128)     # lane (minor) dim of every big block
    p_pad = _round_up(p, 8)       # sublane dim of the (tb, p, c) block
    lp_row = p_pad * c_pad
    # Per-row f32 bytes: logits_p block double-buffered, two full-width
    # in-kernel temporaries (lp upcast + lp_exp), logits_g double-buffered,
    # (TB, C)-shaped temporaries (one_hot / refined / log_preds_g), and the
    # small ca / targets / ce blocks (each padded to 128 lanes, double-buffered).
    row_bytes = 4 * (2 * lp_row       # logits_p (double-buffered)
                     + 2 * lp_row     # lp + lp_exp temporaries
                     + 2 * c_pad      # logits_g (double-buffered)
                     + 3 * c_pad      # (TB, C) temporaries
                     + 6 * 128)       # ca, targets, ce (double-buffered)
    tb = budget_bytes // max(row_bytes, 1)
    tb = max(8, min(1024, (tb // 8) * 8))
    b8 = _round_up(b, 8)
    # >= 4 grid steps when the batch allows it: feeds both v7x TensorCores and
    # gives the double-buffer pipeline something to overlap.
    tb = min(tb, max(8, _round_up(pl.cdiv(b8, 4), 8)))
    return min(tb, b8)


@jax.jit
def pglr_loss(logits_g, logits_p, targets, ca):
    """logits_g: (B, C), logits_p: (B, C, P) (PyTorch layout),
       targets: (B,) int, ca: (B, P) -> scalar f32 loss."""
    b, c, p = logits_p.shape
    vmem_limit, budget = _vmem_limits()
    tb = _choose_batch_tile(b, c, p, budget)
    bp = _round_up(b, tb)

    # Lane-dense layout: classes on the 128-lane axis.  One wrapper-side
    # transpose from the PyTorch (B, C, P) layout; ideally the producer would
    # emit (B, P, C) directly and this becomes free.
    logits_p_t = jnp.transpose(logits_p, (0, 2, 1))                  # (B, P, C)
    tg = targets.astype(jnp.int32).reshape(b, 1)

    if bp != b:  # pad batch to a tile multiple; padded rows sliced off below
        pad = bp - b
        logits_g = jnp.pad(logits_g, ((0, pad), (0, 0)))
        logits_p_t = jnp.pad(logits_p_t, ((0, pad), (0, 0), (0, 0)))
        ca = jnp.pad(ca, ((0, pad), (0, 0)))
        tg = jnp.pad(tg, ((0, pad), (0, 0)))

    ce = pl.pallas_call(
        pglr_kernel,
        out_shape=jax.ShapeDtypeStruct((bp, 1), jnp.float32),
        grid=(bp // tb,),
        in_specs=[
            pl.BlockSpec((tb, c), lambda i: (i, 0)),
            pl.BlockSpec((tb, p, c), lambda i: (i, 0, 0)),
            pl.BlockSpec((tb, 1), lambda i: (i, 0)),
            pl.BlockSpec((tb, p), lambda i: (i, 0)),
        ],
        out_specs=pl.BlockSpec((tb, 1), lambda i: (i, 0)),
        compiler_params=pltpu.CompilerParams(
            dimension_semantics=("parallel",),
            vmem_limit_bytes=vmem_limit,
        ),
    )(logits_g, logits_p_t, tg, ca)

    # TODO(synk): per-tile CE accumulation inside the kernel (lane-dense output)
    # is possible but low value; the (B, 1) writeback + mean here is tiny.
    return jnp.mean(ce[:b, 0])


if __name__ == "__main__":
    key = jax.random.PRNGKey(0)
    B, C, P = 20, 16, 4   # small; B not a multiple of the tile -> exercises padding
    k1, k2, k3, k4 = jax.random.split(key, 4)
    logits_g = jax.random.normal(k1, (B, C), jnp.float32)
    logits_p = jax.random.normal(k2, (B, C, P), jnp.float32)   # PyTorch layout
    targets = jax.random.randint(k3, (B,), 0, C, jnp.int32)
    ca = jax.random.normal(k4, (B, P), jnp.float32)

    loss = pglr_loss(logits_g, logits_p, targets, ca)
    jax.block_until_ready(loss)

    # Pure-JAX reference (mirrors the PyTorch forward).
    one_hot = jax.nn.one_hot(targets, C, dtype=jnp.float32)
    w = jax.nn.softmax(ca, axis=1)[:, None, :]
    preds_p = jax.nn.softmax(logits_p, axis=1)
    ens = jnp.sum(preds_p * w, axis=2)
    refined = LAM * one_hot + (1.0 - LAM) * ens
    logp = jax.nn.log_softmax(logits_g, axis=1)
    ref = jnp.mean(jnp.sum(-refined * logp, axis=1))

    # Tolerance relaxed from 1e-5 because the kernel uses the EUP approximate
    # reciprocal for the two softmax denominators.
    assert jnp.allclose(loss, ref, atol=1e-3, rtol=1e-3), (loss, ref)
    print("KERNEL_OK")
</pallas_src>

<mosaic_0001>
module attributes {stable_mosaic.version = 11 : i64} {
  func.func @pglr_kernel(%arg0: i32, %arg1: memref<8x16xf32, #tpu.memory_space<vmem>>, %arg2: memref<8x4x16xf32, #tpu.memory_space<vmem>>, %arg3: memref<8x1xi32, #tpu.memory_space<vmem>>, %arg4: memref<8x4xf32, #tpu.memory_space<vmem>>, %arg5: memref<8x1xf32, #tpu.memory_space<vmem>>) attributes {dimension_semantics = [#tpu.dimension_semantics<parallel>], iteration_bounds = array<i64: 3>, scalar_prefetch = 0 : i64, scratch_operands = 0 : i64, tpu.core_type = #tpu.core_type<tc>, window_params = [{transform_indices = @transform_0, window_bounds = array<i64: 8, 16>}, {transform_indices = @transform_1, window_bounds = array<i64: 8, 4, 16>}, {transform_indices = @transform_2, window_bounds = array<i64: 8, 1>}, {transform_indices = @transform_3, window_bounds = array<i64: 8, 4>}, {transform_indices = @transform_4, window_bounds = array<i64: 8, 1>}]} {
    %c0 = arith.constant 0 : index
    %c0_0 = arith.constant 0 : index
    %0 = vector.load %arg1[%c0, %c0_0] : memref<8x16xf32, #tpu.memory_space<vmem>>, vector<8x16xf32>
    %c0_1 = arith.constant 0 : index
    %c0_2 = arith.constant 0 : index
    %1 = vector.load %arg3[%c0_1, %c0_2] : memref<8x1xi32, #tpu.memory_space<vmem>>, vector<8x1xi32>
    %c0_3 = arith.constant 0 : index
    %c0_4 = arith.constant 0 : index
    %2 = vector.load %arg4[%c0_3, %c0_4] : memref<8x4xf32, #tpu.memory_space<vmem>>, vector<8x4xf32>
    %3 = tpu.iota {dimensions = array<i32: 1>} : vector<8x16xi32>
    %4 = vector.broadcast %1 : vector<8x1xi32> to vector<8x16xi32>
    %5 = arith.cmpi eq, %3, %4 : vector<8x16xi32>
    %6 = arith.extui %5 : vector<8x16xi1> to vector<8x16xi32>
    %7 = arith.sitofp %6 : vector<8x16xi32> to vector<8x16xf32>
    %cst = arith.constant dense<0xFF800000> : vector<8xf32>
    %8 = vector.multi_reduction <maximumf>, %2, %cst [1] : vector<8x4xf32> to vector<8xf32>
    %9 = vector.shape_cast %8 : vector<8xf32> to vector<8x1xf32>
    %10 = vector.broadcast %9 : vector<8x1xf32> to vector<8x4xf32>
    %11 = arith.subf %2, %10 : vector<8x4xf32>
    %12 = math.exp %11 : vector<8x4xf32>
    %cst_5 = arith.constant dense<0.000000e+00> : vector<8xf32>
    %13 = vector.multi_reduction <add>, %12, %cst_5 [1] : vector<8x4xf32> to vector<8xf32>
    %14 = vector.shape_cast %13 : vector<8xf32> to vector<8x1xf32>
    %15 = tpu.reciprocal %14 {approx = true} : vector<8x1xf32> -> vector<8x1xf32>
    %16 = vector.broadcast %15 : vector<8x1xf32> to vector<8x4xf32>
    %17 = arith.mulf %12, %16 : vector<8x4xf32>
    %c0_6 = arith.constant 0 : index
    %c0_7 = arith.constant 0 : index
    %c0_8 = arith.constant 0 : index
    %18 = vector.load %arg2[%c0_6, %c0_7, %c0_8] : memref<8x4x16xf32, #tpu.memory_space<vmem>>, vector<8x4x16xf32>
    %cst_9 = arith.constant dense<0xFF800000> : vector<8x4xf32>
    %19 = vector.multi_reduction <maximumf>, %18, %cst_9 [2] : vector<8x4x16xf32> to vector<8x4xf32>
    %20 = vector.shape_cast %19 : vector<8x4xf32> to vector<8x4x1xf32>
    %c0_10 = arith.constant 0 : index
    %c0_11 = arith.constant 0 : index
    %c0_12 = arith.constant 0 : index
    %21 = vector.load %arg2[%c0_10, %c0_11, %c0_12] : memref<8x4x16xf32, #tpu.memory_space<vmem>>, vector<8x4x16xf32>
    %22 = vector.broadcast %20 : vector<8x4x1xf32> to vector<8x4x16xf32>
    %23 = arith.subf %21, %22 : vector<8x4x16xf32>
    %24 = math.exp %23 : vector<8x4x16xf32>
    %cst_13 = arith.constant dense<0.000000e+00> : vector<8x4xf32>
    %25 = vector.multi_reduction <add>, %24, %cst_13 [2] : vector<8x4x16xf32> to vector<8x4xf32>
    %26 = vector.shape_cast %25 : vector<8x4xf32> to vector<8x4x1xf32>
    %27 = vector.shape_cast %17 : vector<8x4xf32> to vector<8x4x1xf32>
    %28 = tpu.reciprocal %26 {approx = true} : vector<8x4x1xf32> -> vector<8x4x1xf32>
    %29 = arith.mulf %27, %28 : vector<8x4x1xf32>
    %30 = vector.broadcast %29 : vector<8x4x1xf32> to vector<8x4x16xf32>
    %31 = arith.mulf %24, %30 : vector<8x4x16xf32>
    %cst_14 = arith.constant dense<0.000000e+00> : vector<8x16xf32>
    %32 = vector.multi_reduction <add>, %31, %cst_14 [1] : vector<8x4x16xf32> to vector<8x16xf32>
    %cst_15 = arith.constant 5.000000e-01 : f32
    %33 = vector.broadcast %cst_15 : f32 to vector<8x16xf32>
    %34 = arith.mulf %33, %7 : vector<8x16xf32>
    %cst_16 = arith.constant 5.000000e-01 : f32
    %35 = vector.broadcast %cst_16 : f32 to vector<8x16xf32>
    %36 = arith.mulf %35, %32 : vector<8x16xf32>
    %37 = arith.addf %34, %36 : vector<8x16xf32>
    %cst_17 = arith.constant dense<0xFF800000> : vector<8xf32>
    %38 = vector.multi_reduction <maximumf>, %0, %cst_17 [1] : vector<8x16xf32> to vector<8xf32>
    %39 = vector.shape_cast %38 : vector<8xf32> to vector<8x1xf32>
    %40 = vector.broadcast %39 : vector<8x1xf32> to vector<8x16xf32>
    %41 = arith.subf %0, %40 : vector<8x16xf32>
    %42 = math.exp %41 : vector<8x16xf32>
    %cst_18 = arith.constant dense<0.000000e+00> : vector<8xf32>
    %43 = vector.multi_reduction <add>, %42, %cst_18 [1] : vector<8x16xf32> to vector<8xf32>
    %44 = vector.shape_cast %43 : vector<8xf32> to vector<8x1xf32>
    %45 = math.log %44 : vector<8x1xf32>
    %46 = vector.broadcast %45 : vector<8x1xf32> to vector<8x16xf32>
    %47 = arith.subf %41, %46 : vector<8x16xf32>
    %cst_19 = arith.constant 0.000000e+00 : f32
    %48 = vector.broadcast %cst_19 : f32 to vector<8x16xf32>
    %49 = arith.subf %48, %37 : vector<8x16xf32>
    %50 = arith.mulf %49, %47 : vector<8x16xf32>
    %cst_20 = arith.constant dense<0.000000e+00> : vector<8xf32>
    %51 = vector.multi_reduction <add>, %50, %cst_20 [1] : vector<8x16xf32> to vector<8xf32>
    %52 = vector.shape_cast %51 : vector<8xf32> to vector<8x1xf32>
    %c0_21 = arith.constant 0 : index
    %c0_22 = arith.constant 0 : index
    %53 = vector.load %arg5[%c0_21, %c0_22] : memref<8x1xf32, #tpu.memory_space<vmem>>, vector<8x1xf32>
    tpu.vector_store %arg5[%c0_21, %c0_22], %52 {strides = array<i32>} : memref<8x1xf32, #tpu.memory_space<vmem>>, vector<8x1xf32>,
    return
  }
  func.func @transform_0(%arg0: i32) -> (i32, i32) {
    %c0_i32 = arith.constant 0 : i32
    %c0_i32_0 = arith.constant 0 : i32
    return %arg0, %c0_i32 : i32, i32
  }
  func.func @transform_1(%arg0: i32) -> (i32, i32, i32) {
    %c0_i32 = arith.constant 0 : i32
    %c0_i32_0 = arith.constant 0 : i32
    %c0_i32_1 = arith.constant 0 : i32
    return %arg0, %c0_i32, %c0_i32_0 : i32, i32, i32
  }
  func.func @transform_2(%arg0: i32) -> (i32, i32) {
    %c0_i32 = arith.constant 0 : i32
    %c0_i32_0 = arith.constant 0 : i32
    return %arg0, %c0_i32 : i32, i32
  }
  func.func @transform_3(%arg0: i32) -> (i32, i32) {
    %c0_i32 = arith.constant 0 : i32
    %c0_i32_0 = arith.constant 0 : i32
    return %arg0, %c0_i32 : i32, i32
  }
  func.func @transform_4(%arg0: i32) -> (i32, i32) {
    %c0_i32 = arith.constant 0 : i32
    %c0_i32_0 = arith.constant 0 : i32
    return %arg0, %c0_i32 : i32, i32
  }
}

</mosaic_0001>

<llo_original>
// kernel: pglr_loss.1
$region0: #{pglr_loss.1}
  #allocation0 [shape = 'u32[]', space=smem, size = 0x4, offset = 0x4, fixed_abs, tag = 'smem constant byte address 0x4 - core index']
  #allocation1 [shape = 'u32[144,128]{1,0:T(1,128)}', space=vmem, size = 0x12000, scoped, tag = 'internal scratch']
  %s0 = inlined_call_operand.vmem [shape: f32[24,16], index: 0, kind: input, shape index: {}]
  %s1 = inlined_call_operand.vmem [shape: f32[24,4,16], index: 1, kind: input, shape index: {}]
  %s2 = inlined_call_operand.vmem [shape: s32[24,1], index: 2, kind: input, shape index: {}]
  %s3 = inlined_call_operand.vmem [shape: f32[24,4], index: 3, kind: input, shape index: {}]
  %s4 = inlined_call_operand.vmem [shape: f32[24,1], index: 4, kind: output, shape index: {}]
  %s5 = sld [smem:[#allocation0]]
  $region49: #{pglr_loss.1} parent=0
    _
  %s7 = ssub.s32 1, %s5
  %s8 = scalar_select 0, %s7, %s5
  loop: start=0, step=1, limit=5
  $region2: #{pglr_loss.1} parent=0 // loop_pre_header
    _
  $region3: #{pglr_loss.1} parent=0 // loop_header
    %s10 = sphi 0, %s14
    %p11 = scmp.ge.s32.totalorder %s10, 5
    %s20 = sphi 0, %s22
    %s23 = sphi 0, %s20
    %s24 = sphi 0, %s23
    %s40 = sphi 0, %s24
    %s46 = sphi 0, %s48
    %s49 = sphi 0, %s46
    %s50 = sphi 0, %s49
    %s66 = sphi 0, %s50
    %s72 = sphi 0, %s74
    %s75 = sphi 0, %s72
    %s76 = sphi 0, %s75
    %s92 = sphi 0, %s76
    %s98 = sphi 0, %s100
    %s101 = sphi 0, %s98
    %s102 = sphi 0, %s101
    %s118 = sphi 0, %s102
    %s124 = sphi 0, %s126
    %s127 = sphi 0, %s124
    %s128 = sphi 0, %s127
    %s144 = sphi 0, %s128
  $region4: #{pglr_loss.1} parent=0 // loop_header_branch
    %13 = sbr.rel (%p11) target = $region8
  $region5: #{pglr_loss.1} parent=0 // loop_body
    %s15 = ssub.s32 %s10, 1
    %s16 = ssub.s32 %s10, 2
    %s17 = sadd.s32 %s10, 1
    %s18 = ssub.s32 %s10, %s17
    %p19 = scmp.eq.s32.totalorder %s18, 0
    %s21 = sadd.s32 %s20, 1
    %s22 = scalar_select %p19, %s20, %s21
    %p25 = pneg %p19
    %p26 = scmp.eq.s32.totalorder %s10, 2
    %p27 = por %p25, %p26
    %p28 = scmp.ne.s32.totalorder %s20, %s23
    %p29 = scmp.eq.s32.totalorder %s10, 0
    %p30 = por %p28, %p29
    %p31 = scmp.ne.s32.totalorder %s20, %s23
    %p32 = scmp.eq.s32.totalorder %s15, 2
    %p33 = por %p31, %p32
    %p34 = scmp.ne.s32.totalorder %s23, %s24
    %p35 = scmp.eq.s32.totalorder %s15, 0
    %p36 = por %p34, %p35
    %p37 = scmp.ne.s32.totalorder %s23, %s24
    %p38 = scmp.eq.s32.totalorder %s16, 2
    %p39 = por %p37, %p38
    %p41 = scmp.ne.s32.totalorder %s24, %s40
    %p42 = scmp.eq.s32.totalorder %s16, 0
    %p43 = por %p41, %p42
    %s44 = ssub.s32 %s10, %s17
    %p45 = scmp.eq.s32.totalorder %s44, 0
    %s47 = sadd.s32 %s46, 1
    %s48 = scalar_select %p45, %s46, %s47
    %p51 = pneg %p45
    %p52 = scmp.eq.s32.totalorder %s10, 2
    %p53 = por %p51, %p52
    %p54 = scmp.ne.s32.totalorder %s46, %s49
    %p55 = scmp.eq.s32.totalorder %s10, 0
    %p56 = por %p54, %p55
    %p57 = scmp.ne.s32.totalorder %s46, %s49
    %p58 = scmp.eq.s32.totalorder %s15, 2
    %p59 = por %p57, %p58
    %p60 = scmp.ne.s32.totalorder %s49, %s50
    %p61 = scmp.eq.s32.totalorder %s15, 0
    %p62 = por %p60, %p61
    %p63 = scmp.ne.s32.totalorder %s49, %s50
    %p64 = scmp.eq.s32.totalorder %s16, 2
    %p65 = por %p63, %p64
    %p67 = scmp.ne.s32.totalorder %s50, %s66
    %p68 = scmp.eq.s32.totalorder %s16, 0
    %p69 = por %p67, %p68
    %s70 = ssub.s32 %s10, %s17
    %p71 = scmp.eq.s32.totalorder %s70, 0
    %s73 = sadd.s32 %s72, 1
    %s74 = scalar_select %p71, %s72, %s73
    %p77 = pneg %p71
    %p78 = scmp.eq.s32.totalorder %s10, 2
    %p79 = por %p77, %p78
    %p80 = scmp.ne.s32.totalorder %s72, %s75
    %p81 = scmp.eq.s32.totalorder %s10, 0
    %p82 = por %p80, %p81
    %p83 = scmp.ne.s32.totalorder %s72, %s75
    %p84 = scmp.eq.s32.totalorder %s15, 2
    %p85 = por %p83, %p84
    %p86 = scmp.ne.s32.totalorder %s75, %s76
    %p87 = scmp.eq.s32.totalorder %s15, 0
    %p88 = por %p86, %p87
    %p89 = scmp.ne.s32.totalorder %s75, %s76
    %p90 = scmp.eq.s32.totalorder %s16, 2
    %p91 = por %p89, %p90
    %p93 = scmp.ne.s32.totalorder %s76, %s92
    %p94 = scmp.eq.s32.totalorder %s16, 0
    %p95 = por %p93, %p94
    %s96 = ssub.s32 %s10, %s17
    %p97 = scmp.eq.s32.totalorder %s96, 0
    %s99 = sadd.s32 %s98, 1
    %s100 = scalar_select %p97, %s98, %s99
    %p103 = pneg %p97
    %p104 = scmp.eq.s32.totalorder %s10, 2
    %p105 = por %p103, %p104
    %p106 = scmp.ne.s32.totalorder %s98, %s101
    %p107 = scmp.eq.s32.totalorder %s10, 0
    %p108 = por %p106, %p107
    %p109 = scmp.ne.s32.totalorder %s98, %s101
    %p110 = scmp.eq.s32.totalorder %s15, 2
    %p111 = por %p109, %p110
    %p112 = scmp.ne.s32.totalorder %s101, %s102
    %p113 = scmp.eq.s32.totalorder %s15, 0
    %p114 = por %p112, %p113
    %p115 = scmp.ne.s32.totalorder %s101, %s102
    %p116 = scmp.eq.s32.totalorder %s16, 2
    %p117 = por %p115, %p116
    %p119 = scmp.ne.s32.totalorder %s102, %s118
    %p120 = scmp.eq.s32.totalorder %s16, 0
    %p121 = por %p119, %p120
    %s122 = ssub.s32 %s10, %s17
    %p123 = scmp.eq.s32.totalorder %s122, 0
    %s125 = sadd.s32 %s124, 1
    %s126 = scalar_select %p123, %s124, %s125
    %p129 = pneg %p123
    %p130 = scmp.eq.s32.totalorder %s10, 2
    %p131 = por %p129, %p130
    %p132 = scmp.ne.s32.totalorder %s124, %s127
    %p133 = scmp.eq.s32.totalorder %s10, 0
    %p134 = por %p132, %p133
    %p135 = scmp.ne.s32.totalorder %s124, %s127
    %p136 = scmp.eq.s32.totalorder %s15, 2
    %p137 = por %p135, %p136
    %p138 = scmp.ne.s32.totalorder %s127, %s128
    %p139 = scmp.eq.s32.totalorder %s15, 0
    %p140 = por %p138, %p139
    %p141 = scmp.ne.s32.totalorder %s127, %s128
    %p142 = scmp.eq.s32.totalorder %s16, 2
    %p143 = por %p141, %p142
    %p145 = scmp.ne.s32.totalorder %s128, %s144
    %p146 = scmp.eq.s32.totalorder %s16, 0
    %p147 = por %p145, %p146
    %p148 = scmp.le.s32.totalorder 1, %s10
    %p149 = scmp.lt.s32.totalorder %s10, 4
    %p150 = pnand %p148, %p149
    %p151 = pneg %p150
    // Predicated region
    $region9: #{pglr_loss.1} parent=5 // pred_check
      _
    $region10: #{pglr_loss.1} parent=5 // pred_check_branch
      %153 = sbr.rel (%p150) target = $region12
    $region11: #{pglr_loss.1} parent=5 // pred_region
      %s154 = ssub.s32 %s10, 1
    $region12: #{pglr_loss.1} parent=5 // pred_fallthru
      _
    %p155 = scmp.lt.s32.totalorder %s10, 3
    // Predicated region
    $region13: #{pglr_loss.1} parent=5 // pred_check
      %p156 = pneg %p155
    $region14: #{pglr_loss.1} parent=5 // pred_check_branch
      %158 = sbr.rel (%p156) target = $region16
    $region15: #{pglr_loss.1} parent=5 // pred_region
      // Predicated region
      $region17: #{pglr_loss.1} parent=15 // pred_check
        %p159 = pneg %p30
      $region18: #{pglr_loss.1} parent=15 // pred_check_branch
        %161 = sbr.rel (%p159) target = $region20
      $region19: #{pglr_loss.1} parent=15 // pred_region
        %p162 = scmp.lt.s32.totalorder %s10, 2
        %s163 = scalar_select %p162, %s10, 2
        %s164 = smul.addr %s163, 8
        %s165 = scalar_lea.vmem %s0, %s164
      $region20: #{pglr_loss.1} parent=15 // pred_fallthru
        _
      // Predicated region
      $region21: #{pglr_loss.1} parent=15 // pred_check
        %p166 = pneg %p56
      $region22: #{pglr_loss.1} parent=15 // pred_check_branch
        %168 = sbr.rel (%p166) target = $region24
      $region23: #{pglr_loss.1} parent=15 // pred_region
        %s169 = smul.u32 8, %s10
        %p170 = scmp.lt.s32.totalorder %s169, 23
        %s171 = scalar_select %p170, %s169, 23
        %s172 = smul.addr %s171, 4
        %s173 = scalar_lea.vmem %s1, %s172
        %s174 = smul.u32 8, %s10
      $region24: #{pglr_loss.1} parent=15 // pred_fallthru
        _
      // Predicated region
      $region25: #{pglr_loss.1} parent=15 // pred_check
        %p175 = pneg %p82
      $region26: #{pglr_loss.1} parent=15 // pred_check_branch
        %177 = sbr.rel (%p175) target = $region28
      $region27: #{pglr_loss.1} parent=15 // pred_region
        %p178 = scmp.lt.s32.totalorder %s10, 2
        %s179 = scalar_select %p178, %s10, 2
        %s180 = smul.addr %s179, 8
        %s181 = scalar_lea.vmem %s2, %s180
      $region28: #{pglr_loss.1} parent=15 // pred_fallthru
        _
      // Predicated region
      $region29: #{pglr_loss.1} parent=15 // pred_check
        %p182 = pneg %p108
      $region30: #{pglr_loss.1} parent=15 // pred_check_branch
        %184 = sbr.rel (%p182) target = $region32
      $region31: #{pglr_loss.1} parent=15 // pred_region
        %p185 = scmp.lt.s32.totalorder %s10, 2
        %s186 = scalar_select %p185, %s10, 2
        %s187 = smul.addr %s186, 8
        %s188 = scalar_lea.vmem %s3, %s187
      $region32: #{pglr_loss.1} parent=15 // pred_fallthru
        _
    $region16: #{pglr_loss.1} parent=5 // pred_fallthru
      _
    %p189 = scmp.le.s32.totalorder 1, %s10
    %p190 = scmp.lt.s32.totalorder %s10, 4
    %p191 = pnand %p189, %p190
    %p192 = pneg %p191
    // Predicated region
    $region33: #{pglr_loss.1} parent=5 // pred_check
      _
    $region34: #{pglr_loss.1} parent=5 // pred_check_branch
      %194 = sbr.rel (%p191) target = $region36
    $region35: #{pglr_loss.1} parent=5 // pred_region
      %s195 = ssub.s32 %s10, 1
      %p196 = scmp.lt.s32.totalorder %s15, 2
      %s197 = scalar_select %p196, %s15, 2
      %s198 = smul.addr %s197, 8
      %s199 = scalar_lea.vmem %s0, %s198
      %p200 = pneg %p36
      %p201 = pneg %p33
      %s202 = smul.u32 8, %s15
      %p203 = scmp.lt.s32.totalorder %s202, 23
      %s204 = scalar_select %p203, %s202, 23
      %s205 = smul.addr %s204, 4
      %s206 = scalar_lea.vmem %s1, %s205
      %p207 = pneg %p62
      %p208 = pneg %p59
      %p209 = scmp.lt.s32.totalorder %s15, 2
      %s210 = scalar_select %p209, %s15, 2
      %s211 = smul.addr %s210, 8
      %s212 = scalar_lea.vmem %s2, %s211
      %p213 = pneg %p88
      %p214 = pneg %p85
      %p215 = scmp.lt.s32.totalorder %s15, 2
      %s216 = scalar_select %p215, %s15, 2
      %s217 = smul.addr %s216, 8
      %s218 = scalar_lea.vmem %s3, %s217
      %p219 = pneg %p114
      %p220 = pneg %p111
      %p221 = pneg %p140
      %p222 = pneg %p137
      %p223 = scmp.lt.s32.totalorder %s15, 2
      %s224 = scalar_select %p223, %s15, 2
      %s225 = smul.addr %s224, 8
      %s226 = scalar_lea.vmem %s4, %s225
      %p227 = scmp.lt.s32.totalorder %s15, 2
      %s228 = scalar_select %p227, %s15, 2
      %s229 = smul.addr %s228, 8
      %s230 = scalar_lea.vmem %s0, %s229
      %s231 = smul.u32 8, %s15
      %p232 = scmp.lt.s32.totalorder %s231, 23
      %s233 = scalar_select %p232, %s231, 23
      %s234 = smul.addr %s233, 4
      %s235 = scalar_lea.vmem %s1, %s234
      %s236 = smul.u32 8, %s15
      %p237 = scmp.lt.s32.totalorder %s15, 2
      %s238 = scalar_select %p237, %s15, 2
      %s239 = smul.addr %s238, 8
      %s240 = scalar_lea.vmem %s2, %s239
      %p241 = scmp.lt.s32.totalorder %s15, 2
      %s242 = scalar_select %p241, %s15, 2
      %s243 = smul.addr %s242, 8
      %s244 = scalar_lea.vmem %s3, %s243
      %p245 = scmp.lt.s32.totalorder %s15, 2
      %s246 = scalar_select %p245, %s15, 2
      %s247 = smul.addr %s246, 8
      %s248 = scalar_lea.vmem %s4, %s247
      %v249 = vld [vmem:[%s230] sm:$0xff]
      %v250 = vld [vmem:[%s240] sm:$0xff]
      %v251 = vld [vmem:[%s244] sm:$0xff]
      %v252 = vlaneseq
      %v253 = vand.u32 %v252, 127
      %254 = vset.pattern.permute.xlu0 0
      %255 = vperm.xlu0 %254, %v250
      %v256 = vpop.permute.xlu0 %255
      %vm257 = vcmp.eq.s32.totalorder %v253, %v256
      %v258 = vsel %vm257, 1, 0
      %v259 = vcvt.s32.f32 %v258
      %vm260 = vcmask 31744
      %v261 = vsel %vm260, %v251, -inf
      %262 = vmax.xlane.f32.xlu0 %v261
      %v263 = vpop.xlane.xlu0 %262
      %v264 = vsub.f32 %v251, %v263
      %v265 = vmul.f32 %v264, 1.442695
      %v266 = vpow.pop %v265
      %v267 = vsel %vm260, %v266, 0.0
      %268 = vadd.xlane.f32.xlu0 %v267
      %v269 = vpop.xlane.xlu0 %268
      %v270 = vrcp.pop %v269
      %v271 = vmul.f32 %v266, %v270
      %v272 = vld [vmem:[%s235] sm:$0xf]
      %v273 = vld [vmem:[%s235 + $0x4] sm:$0xf]
      %v274 = vld [vmem:[%s235 + $0x8] sm:$0xf]
      %v275 = vld [vmem:[%s235 + $0xc] sm:$0xf]
      %v276 = vld [vmem:[%s235 + $0x10] sm:$0xf]
      %v277 = vld [vmem:[%s235 + $0x14] sm:$0xf]
      %v278 = vld [vmem:[%s235 + $0x18] sm:$0xf]
      %v279 = vld [vmem:[%s235 + $0x1c] sm:$0xf]
      %vm280 = vcmask 125952
      %v281 = vsel %vm280, %v272, -inf
      %282 = vmax.xlane.f32.xlu0 %v281
      %v283 = vpop.xlane.xlu0 %282
      %v284 = vsel %vm280, %v273, -inf
      %285 = vmax.xlane.f32.xlu0 %v284
      %v286 = vpop.xlane.xlu0 %285
      %v287 = vsel %vm280, %v274, -inf
      %288 = vmax.xlane.f32.xlu0 %v287
      %v289 = vpop.xlane.xlu0 %288
      %v290 = vsel %vm280, %v275, -inf
      %291 = vmax.xlane.f32.xlu0 %v290
      %v292 = vpop.xlane.xlu0 %291
      %v293 = vsel %vm280, %v276, -inf
      %294 = vmax.xlane.f32.xlu0 %v293
      %v295 = vpop.xlane.xlu0 %294
      %v296 = vsel %vm280, %v277, -inf
      %297 = vmax.xlane.f32.xlu0 %v296
      %v298 = vpop.xlane.xlu0 %297
      %v299 = vsel %vm280, %v278, -inf
      %300 = vmax.xlane.f32.xlu0 %v299
      %v301 = vpop.xlane.xlu0 %300
      %v302 = vsel %vm280, %v279, -inf
      %303 = vmax.xlane.f32.xlu0 %v302
      %v304 = vpop.xlane.xlu0 %303
      %v305 = vsub.f32 %v272, %v283
      %v306 = vsub.f32 %v273, %v286
      %v307 = vsub.f32 %v274, %v289
      %v308 = vsub.f32 %v275, %v292
      %v309 = vsub.f32 %v276, %v295
      %v310 = vsub.f32 %v277, %v298
      %v311 = vsub.f32 %v278, %v301
      %v312 = vsub.f32 %v279, %v304
      %v313 = vmul.f32 %v305, 1.442695
      %v314 = vpow.pop %v313
      %v315 = vmul.f32 %v306, 1.442695
      %v316 = vpow.pop %v315
      %v317 = vmul.f32 %v307, 1.442695
      %v318 = vpow.pop %v317
      %v319 = vmul.f32 %v308, 1.442695
      %v320 = vpow.pop %v319
      %v321 = vmul.f32 %v309, 1.442695
      %v322 = vpow.pop %v321
      %v323 = vmul.f32 %v310, 1.442695
      %v324 = vpow.pop %v323
      %v325 = vmul.f32 %v311, 1.442695
      %v326 = vpow.pop %v325
      %v327 = vmul.f32 %v312, 1.442695
      %v328 = vpow.pop %v327
      %v329 = vsel %vm280, %v314, 0.0
      %330 = vadd.xlane.f32.xlu0 %v329
      %v331 = vpop.xlane.xlu0 %330
      %v332 = vsel %vm280, %v316, 0.0
      %333 = vadd.xlane.f32.xlu0 %v332
      %v334 = vpop.xlane.xlu0 %333
      %v335 = vsel %vm280, %v318, 0.0
      %336 = vadd.xlane.f32.xlu0 %v335
      %v337 = vpop.xlane.xlu0 %336
      %v338 = vsel %vm280, %v320, 0.0
      %339 = vadd.xlane.f32.xlu0 %v338
      %v340 = vpop.xlane.xlu0 %339
      %v341 = vsel %vm280, %v322, 0.0
      %342 = vadd.xlane.f32.xlu0 %v341
      %v343 = vpop.xlane.xlu0 %342
      %v344 = vsel %vm280, %v324, 0.0
      %345 = vadd.xlane.f32.xlu0 %v344
      %v346 = vpop.xlane.xlu0 %345
      %v347 = vsel %vm280, %v326, 0.0
      %348 = vadd.xlane.f32.xlu0 %v347
      %v349 = vpop.xlane.xlu0 %348
      %v350 = vsel %vm280, %v328, 0.0
      %351 = vadd.xlane.f32.xlu0 %v350
      %v352 = vpop.xlane.xlu0 %351
      %v353 = vlaneseq
      %v354 = vshrl.u32 %v353, 7
      %v355 = vsub.s32 0, %v354
      %v356 = vrot.slane %v271, %v355
      %358 = vbcast.lane.b32.xlu0 %v356, 256
      %v359 = vpop.permute.xlu0 %358
      %v360 = vlaneseq
      %v361 = vshrl.u32 %v360, 7
      %v362 = vsub.s32 1, %v361
      %v363 = vrot.slane %v271, %v362
      %365 = vbcast.lane.b32.xlu0 %v363, 256
      %v366 = vpop.permute.xlu0 %365
      %v367 = vlaneseq
      %v368 = vshrl.u32 %v367, 7
      %v369 = vsub.s32 2, %v368
      %v370 = vrot.slane %v271, %v369
      %372 = vbcast.lane.b32.xlu0 %v370, 256
      %v373 = vpop.permute.xlu0 %372
      %v374 = vlaneseq
      %v375 = vshrl.u32 %v374, 7
      %v376 = vsub.s32 3, %v375
      %v377 = vrot.slane %v271, %v376
      %379 = vbcast.lane.b32.xlu0 %v377, 256
      %v380 = vpop.permute.xlu0 %379
      %v381 = vlaneseq
      %v382 = vshrl.u32 %v381, 7
      %v383 = vsub.s32 4, %v382
      %v384 = vrot.slane %v271, %v383
      %386 = vbcast.lane.b32.xlu0 %v384, 256
      %v387 = vpop.permute.xlu0 %386
      %v388 = vlaneseq
      %v389 = vshrl.u32 %v388, 7
      %v390 = vsub.s32 5, %v389
      %v391 = vrot.slane %v271, %v390
      %393 = vbcast.lane.b32.xlu0 %v391, 256
      %v394 = vpop.permute.xlu0 %393
      %v395 = vlaneseq
      %v396 = vshrl.u32 %v395, 7
      %v397 = vsub.s32 6, %v396
      %v398 = vrot.slane %v271, %v397
      %400 = vbcast.lane.b32.xlu0 %v398, 256
      %v401 = vpop.permute.xlu0 %400
      %v402 = vlaneseq
      %v403 = vshrl.u32 %v402, 7
      %v404 = vsub.s32 7, %v403
      %v405 = vrot.slane %v271, %v404
      %407 = vbcast.lane.b32.xlu0 %v405, 256
      %v408 = vpop.permute.xlu0 %407
      %v409 = vrcp.pop %v331
      %v410 = vrcp.pop %v334
      %v411 = vrcp.pop %v337
      %v412 = vrcp.pop %v340
      %v413 = vrcp.pop %v343
      %v414 = vrcp.pop %v346
      %v415 = vrcp.pop %v349
      %v416 = vrcp.pop %v352
      %v417 = vmul.f32 %v359, %v409
      %v418 = vmul.f32 %v366, %v410
      %v419 = vmul.f32 %v373, %v411
      %v420 = vmul.f32 %v380, %v412
      %v421 = vmul.f32 %v387, %v413
      %v422 = vmul.f32 %v394, %v414
      %v423 = vmul.f32 %v401, %v415
      %v424 = vmul.f32 %v408, %v416
      %v425 = vmul.f32 %v314, %v417
      %v426 = vmul.f32 %v316, %v418
      %v427 = vmul.f32 %v318, %v419
      %v428 = vmul.f32 %v320, %v420
      %v429 = vmul.f32 %v322, %v421
      %v430 = vmul.f32 %v324, %v422
      %v431 = vmul.f32 %v326, %v423
      %v432 = vmul.f32 %v328, %v424
      %v433 = vsel %vm280, %v425, 0.0
      %v434 = vrot.slane %v433, 4
      %v435 = vadd.f32 %v433, %v434
      %v436 = vrot.slane %v435, 2
      %v437 = vadd.f32 %v435, %v436
      %v438 = vrot.slane %v437, 1
      %v439 = vadd.f32 %v437, %v438
      %v440 = vsel %vm280, %v426, 0.0
      %v441 = vrot.slane %v440, 4
      %v442 = vadd.f32 %v440, %v441
      %v443 = vrot.slane %v442, 2
      %v444 = vadd.f32 %v442, %v443
      %v445 = vrot.slane %v444, 1
      %v446 = vadd.f32 %v444, %v445
      %v447 = vsel %vm280, %v427, 0.0
      %v448 = vrot.slane %v447, 4
      %v449 = vadd.f32 %v447, %v448
      %v450 = vrot.slane %v449, 2
      %v451 = vadd.f32 %v449, %v450
      %v452 = vrot.slane %v451, 1
      %v453 = vadd.f32 %v451, %v452
      %v454 = vsel %vm280, %v428, 0.0
      %v455 = vrot.slane %v454, 4
      %v456 = vadd.f32 %v454, %v455
      %v457 = vrot.slane %v456, 2
      %v458 = vadd.f32 %v456, %v457
      %v459 = vrot.slane %v458, 1
      %v460 = vadd.f32 %v458, %v459
      %v461 = vsel %vm280, %v429, 0.0
      %v462 = vrot.slane %v461, 4
      %v463 = vadd.f32 %v461, %v462
      %v464 = vrot.slane %v463, 2
      %v465 = vadd.f32 %v463, %v464
      %v466 = vrot.slane %v465, 1
      %v467 = vadd.f32 %v465, %v466
      %v468 = vsel %vm280, %v430, 0.0
      %v469 = vrot.slane %v468, 4
      %v470 = vadd.f32 %v468, %v469
      %v471 = vrot.slane %v470, 2
      %v472 = vadd.f32 %v470, %v471
      %v473 = vrot.slane %v472, 1
      %v474 = vadd.f32 %v472, %v473
      %v475 = vsel %vm280, %v431, 0.0
      %v476 = vrot.slane %v475, 4
      %v477 = vadd.f32 %v475, %v476
      %v478 = vrot.slane %v477, 2
      %v479 = vadd.f32 %v477, %v478
      %v480 = vrot.slane %v479, 1
      %v481 = vadd.f32 %v479, %v480
      %v482 = vsel %vm280, %v432, 0.0
      %v483 = vrot.slane %v482, 4
      %v484 = vadd.f32 %v482, %v483
      %v485 = vrot.slane %v484, 2
      %v486 = vadd.f32 %v484, %v485
      %v487 = vrot.slane %v486, 1
      %v488 = vadd.f32 %v486, %v487
      %v489 = vmul.f32 %v259, 0.5
      %v490 = vmul.f32 %v439, 0.5
      %v491 = vmul.f32 %v446, 0.5
      %v492 = vmul.f32 %v453, 0.5
      %v493 = vmul.f32 %v460, 0.5
      %v494 = vmul.f32 %v467, 0.5
      %v495 = vmul.f32 %v474, 0.5
      %v496 = vmul.f32 %v481, 0.5
      %v497 = vmul.f32 %v488, 0.5
      %vm506 = vcmask 1041409
      %v507 = vsel %vm506, %v491, %v490
      %vm508 = vcmask 1042434
      %v509 = vsel %vm508, %v492, %v507
      %vm510 = vcmask 1043459
      %v511 = vsel %vm510, %v493, %v509
      %vm512 = vcmask 1044484
      %v513 = vsel %vm512, %v494, %v511
      %vm514 = vcmask 1045509
      %v515 = vsel %vm514, %v495, %v513
      %vm516 = vcmask 1046534
      %v517 = vsel %vm516, %v496, %v515
      %vm518 = vcmask 1047559
      %v519 = vsel %vm518, %v497, %v517
      %v521 = vadd.f32 %v489, %v519
      %vm522 = vcmask 130048
      %v523 = vsel %vm522, %v249, -inf
      %524 = vmax.xlane.f32.xlu0 %v523
      %v525 = vpop.xlane.xlu0 %524
      %v526 = vsub.f32 %v249, %v525
      %v527 = vmul.f32 %v526, 1.442695
      %v528 = vpow.pop %v527
      %v529 = vsel %vm522, %v528, 0.0
      %530 = vadd.xlane.f32.xlu0 %v529
      %v531 = vpop.xlane.xlu0 %530
      %v532 = vlog2.pop %v531
      %v533 = vmul.f32 %v532, 0.6931472
      %v534 = vsub.f32 %v526, %v533
      %v535 = vsub.f32 0.0, %v521
      %v536 = vmul.f32 %v535, %v534
      %v537 = vsel %vm522, %v536, 0.0
      %538 = vadd.xlane.f32.xlu0 %v537
      %v539 = vpop.xlane.xlu0 %538
      %vm540 = vcmask 7168
      %541 = vst.msk [vmem:[%s248] sm:$0xff] %vm540, %v539
      %p542 = scmp.lt.s32.totalorder %s15, 2
      %s543 = scalar_select %p542, %s15, 2
      %s544 = smul.addr %s543, 8
      %s545 = scalar_lea.vmem %s4, %s544
      // Predicated region
      $region37: #{pglr_loss.1} parent=35 // pred_check
        %p546 = pneg %p137
      $region38: #{pglr_loss.1} parent=35 // pred_check_branch
        %548 = sbr.rel (%p546) target = $region40
      $region39: #{pglr_loss.1} parent=35 // pred_region
        _
      $region40: #{pglr_loss.1} parent=35 // pred_fallthru
        _
    $region36: #{pglr_loss.1} parent=5 // pred_fallthru
      _
    %p549 = scmp.le.s32.totalorder 2, %s10
    // Predicated region
    $region41: #{pglr_loss.1} parent=5 // pred_check
      %p550 = pneg %p549
    $region42: #{pglr_loss.1} parent=5 // pred_check_branch
      %552 = sbr.rel (%p550) target = $region44
    $region43: #{pglr_loss.1} parent=5 // pred_region
      %s553 = ssub.s32 %s10, 2
      // Predicated region
      $region45: #{pglr_loss.1} parent=43 // pred_check
        %p554 = pneg %p143
      $region46: #{pglr_loss.1} parent=43 // pred_check_branch
        %556 = sbr.rel (%p554) target = $region48
      $region47: #{pglr_loss.1} parent=43 // pred_region
        %p557 = scmp.lt.s32.totalorder %s16, 2
        %s558 = scalar_select %p557, %s16, 2
        %s559 = smul.addr %s558, 8
        %s560 = scalar_lea.vmem %s4, %s559
      $region48: #{pglr_loss.1} parent=43 // pred_fallthru
        _
    $region44: #{pglr_loss.1} parent=5 // pred_fallthru
      _
  $region6: #{pglr_loss.1} parent=0 // loop_footer
    %s14 = sadd.s32 1, %s10
  $region7: #{pglr_loss.1} parent=0 // loop_footer_branch
    %9 = sbr.rel target = $region3
  $region8: #{pglr_loss.1} parent=0 // loop_exit
    _

</llo_original>
